<compile_context>
chip_gen: v7x
topology: tpu7x:2x2x1
jax: 0.10.0
libtpu: 0.0.40
codegen_flags: <defaults>
</compile_context>

<pallas_src>
import functools
from types import SimpleNamespace

import jax
import jax.numpy as jnp
from jax import lax
from jax.experimental import pallas as pl
from jax.experimental.pallas import tpu as pltpu


# Contract the last axis of both operands: 'nk,mk->nm' (no operand transposes).
_CONTRACT_LAST = (((1,), (1,)), ((), ()))


def _round_up(x, m):
    return ((x + m - 1) // m) * m


def _vmem_limit_bytes(t, k, c):
    # Rough per-step footprint: double-buffered input blocks + live f32 temps.
    in_blocks = 2 * (t * k * 4 + t * k * 2 + 2 * t * c * 2 + t * k * 2 + c * k * 2)
    temps = 6 * t * t * 4
    outs = 2 * 3 * 8 * 128 * 4
    scratch = t * k * 2
    est = in_blocks + temps + outs + scratch
    return int(min(max(4 * est, 32 * 1024 * 1024), 56 * 1024 * 1024))


# --------------------------------------------------------------------------- #
# Fused loss kernel: (i, j) tile grid over the batch axis.
# --------------------------------------------------------------------------- #
def _kiddo_tiled_kernel(f_i_ref, fb_j_ref, l_i_ref, l_j_ref, b_i_ref, tk_ref,
                        sim_out_ref, qua_out_ref, ali_out_ref,
                        fbi_ref, acc_ref, *, n, tile, padded):
    i = pl.program_id(0)
    j = pl.program_id(1)
    nj = pl.num_programs(1)

    # ---- once per i-block (j == 0): resident-block prep + O(N) loss terms ---
    @pl.when(j == 0)
    def _init():
        f_i = f_i_ref[...]                           # (T, K) f32
        fbi_ref[...] = f_i.astype(jnp.bfloat16)      # cache bf16 cast of F_i
        b_i = b_i_ref[...]                           # (T, K) bf16, entries +-1

        # Quantization loss partial: sum((F - sign(B[idx]))^2) over row block.
        dq = f_i - jnp.sign(b_i.astype(jnp.float32))
        acc_ref[1] = jnp.sum(dq * dq)

        # Alignment loss partial: logits = B[idx] @ Tk^T ; sum((L - logits)^2).
        logits = lax.dot_general(b_i, tk_ref[...], _CONTRACT_LAST,
                                 preferred_element_type=jnp.float32)
        da = l_i_ref[...].astype(jnp.float32) - logits
        acc_ref[2] = jnp.sum(da * da)

        acc_ref[0] = 0.0

    # ---- N^2 sim term: only j >= i blocks (theta / gram are symmetric) ------
    @pl.when(j >= i)
    def _sim_block():
        theta = lax.dot_general(fbi_ref[...], fb_j_ref[...], _CONTRACT_LAST,
                                preferred_element_type=jnp.float32) * 0.5
        gram = lax.dot_general(l_i_ref[...], l_j_ref[...], _CONTRACT_LAST,
                               preferred_element_type=jnp.float32)
        # log(1+e^{-|t|}) + max(t,0) - sim*t == stable softplus(where(sim,-t,t)).
        z = jnp.where(gram > 0.0, -theta, theta)
        terms = jnp.log(1.0 + jnp.exp(-jnp.abs(z))) + jnp.maximum(z, 0.0)
        if padded:  # static flag: only traced when N was padded to the tile
            rows = i * tile + lax.broadcasted_iota(jnp.int32, (tile, tile), 0)
            cols = j * tile + lax.broadcasted_iota(jnp.int32, (tile, tile), 1)
            terms = jnp.where((rows < n) & (cols < n), terms, 0.0)
        weight = jnp.where(j > i, 2.0, 1.0)   # off-diagonal blocks counted twice
        acc_ref[0] += weight * jnp.sum(terms)

    # ---- flush per-i partial sums once, at the last j ------------------------
    @pl.when(j == nj - 1)
    def _flush():
        ones = jnp.ones(sim_out_ref.shape, jnp.float32)
        sim_out_ref[...] = acc_ref[0] * ones
        qua_out_ref[...] = acc_ref[1] * ones
        ali_out_ref[...] = acc_ref[2] * ones


def kiddo_losses_pallas(F, L, Bb, Tk, *, tile=512):
    """Returns (sim_loss, ali_loss, qua_loss) for the KiddoCriterion forward."""
    n, k = F.shape
    c = L.shape[1]

    t = min(int(tile), _round_up(n, 8))
    t = max(8, _round_up(t, 8))
    n_pad = _round_up(n, t)
    pad = n_pad - n
    if pad:
        F = jnp.pad(F, ((0, pad), (0, 0)))
        L = jnp.pad(L, ((0, pad), (0, 0)))
        Bb = jnp.pad(Bb, ((0, pad), (0, 0)))

    Fb = F.astype(jnp.bfloat16)        # streamed j-operand (bf16)
    Lb = L.astype(jnp.bfloat16)        # 0/1 exact in bf16
    Bb = Bb.astype(jnp.bfloat16)       # +-1 exact in bf16
    Tkb = Tk.astype(jnp.bfloat16)
    n_blk = n_pad // t

    kernel = functools.partial(_kiddo_tiled_kernel, n=n, tile=t, padded=bool(pad))

    out_shape = tuple(jax.ShapeDtypeStruct((n_blk, 8, 128), jnp.float32)
                      for _ in range(3))
    out_spec = pl.BlockSpec((1, 8, 128), lambda i, j: (i, 0, 0))

    flops = int(2 * n * n * k + 2 * n * n * c + 2 * n * k * c + 8 * n * n)
    cost = pl.CostEstimate(
        flops=flops,
        transcendentals=int(2 * n * n),
        bytes_accessed=int(4 * n * k + (2 * n * k + 2 * n * c) * (n_blk + 1)
                           + 2 * n * c + 2 * c * k))

    sim_p, qua_p, ali_p = pl.pallas_call(
        kernel,
        grid=(n_blk, n_blk),
        in_specs=[
            pl.BlockSpec((t, k), lambda i, j: (i, 0)),   # F_i   (f32, resident)
            pl.BlockSpec((t, k), lambda i, j: (j, 0)),   # F_j   (bf16, streamed)
            pl.BlockSpec((t, c), lambda i, j: (i, 0)),   # L_i   (bf16)
            pl.BlockSpec((t, c), lambda i, j: (j, 0)),   # L_j   (bf16, streamed)
            pl.BlockSpec((t, k), lambda i, j: (i, 0)),   # B[idx]_i (bf16)
            pl.BlockSpec((c, k), lambda i, j: (0, 0)),   # Tk    (bf16)
        ],
        out_specs=(out_spec, out_spec, out_spec),
        out_shape=out_shape,
        scratch_shapes=[pltpu.VMEM((t, k), jnp.bfloat16),   # cached bf16 F_i
                        pltpu.SMEM((3,), jnp.float32)],     # sim/qua/ali accum
        compiler_params=pltpu.CompilerParams(
            dimension_semantics=("parallel", "arbitrary"),
            vmem_limit_bytes=_vmem_limit_bytes(t, k, c)),
        cost_estimate=cost,
    )(F, Fb, Lb, Lb, Bb, Tkb)

    sim_loss = jnp.sum(sim_p[:, 0, 0]) * (1.0 / float(n * n))
    qua_loss = jnp.sum(qua_p[:, 0, 0]) * (1.0 / float(n * k))
    ali_loss = jnp.sum(ali_p[:, 0, 0]) * (1.0 / float(n * c))
    return sim_loss, ali_loss, qua_loss


# --------------------------------------------------------------------------- #
# In-place row scatter U[idx, :] = F via aliased DMA (no full copy of U).
# --------------------------------------------------------------------------- #
def _row_scatter_kernel(idx_ref, src_ref, u_in_ref, u_out_ref, copy_sem):
    del u_in_ref  # aliased with u_out_ref: untouched rows are preserved in place
    num_rows = src_ref.shape[0]

    def body(r, carry):
        row = idx_ref[r]
        cp = pltpu.make_async_copy(src_ref.at[pl.ds(r, 1), :],
                                   u_out_ref.at[pl.ds(row, 1), :],
                                   copy_sem)
        cp.start()
        cp.wait()
        return carry

    lax.fori_loop(0, num_rows, body, 0)


def update_hash_codes_inplace(U, feats, idx):
    """U[idx, :] = feats with U updated in place (input/output aliasing)."""
    return pl.pallas_call(
        _row_scatter_kernel,
        out_shape=jax.ShapeDtypeStruct(U.shape, U.dtype),
        in_specs=[pl.BlockSpec(memory_space=pltpu.MemorySpace.SMEM),
                  pl.BlockSpec(memory_space=pltpu.MemorySpace.VMEM),
                  pl.BlockSpec(memory_space=pl.ANY)],
        out_specs=pl.BlockSpec(memory_space=pl.ANY),
        scratch_shapes=[pltpu.SemaphoreType.DMA],
        input_output_aliases={2: 0},
        compiler_params=pltpu.CompilerParams(has_side_effects=True),
    )(idx.astype(jnp.int32), feats.astype(U.dtype), U)


# --------------------------------------------------------------------------- #
# Module port.
# --------------------------------------------------------------------------- #
class KiddoCriterionJAX:
    """JAX/Pallas port of KiddoCriterion (forward only)."""

    def __init__(self, cfg, num_train, train_onehot_labels, key, tile=512):
        self.cfg = cfg
        self.alpha = cfg.ALPHA
        self.beta = cfg.BETA
        self.gamma = cfg.GAMMA
        self.bits = cfg.BITS
        self.tile = tile
        # Buffers stored row-major (num_train, K): per-batch access is a
        # contiguous row gather / row scatter (transposed vs. the PyTorch
        # layout; forward semantics identical).  B holds exact +-1 so bf16 is
        # lossless and halves its HBM/VMEM footprint.
        self.B = jnp.sign(jax.random.normal(
            key, (num_train, cfg.BITS), dtype=jnp.float32)).astype(jnp.bfloat16)
        self.U = jnp.zeros((num_train, cfg.BITS), dtype=jnp.float32)
        self.Y = jnp.asarray(train_onehot_labels).T.astype(jnp.float32)
        self.W = None

    def forward(self, outputs, batch_data):
        F = outputs["image_hash_features"].astype(jnp.float32)   # (N, K)
        tk = outputs["textual_knowledge"].astype(jnp.float32)    # (C, K)
        L = batch_data["onehot_labels"].astype(jnp.float32)      # (N, C)
        idx = batch_data["indices"].astype(jnp.int32)            # (N,)

        self.W = tk.T                                   # (K, C), DCC parity only
        # In-place row scatter U[idx] = F (no O(num_train*K) HBM copy per step).
        self.U = update_hash_codes_inplace(self.U, F, idx)
        # Row gather of the sign codes for this batch (bf16, entries +-1).
        Bb = self.B[idx]                                # (N, K)
        # TODO(synk): fuse this gather into the loss kernel with a per-row DMA
        # gather driven by scalar-prefetched idx, removing the (N,K) HBM round trip.

        sim_loss, ali_loss, qua_loss = kiddo_losses_pallas(
            F, L, Bb, tk, tile=self.tile)
        loss = (self.gamma * sim_loss + self.alpha * ali_loss
                + self.beta * qua_loss)
        return {"loss": loss, "sim_loss": sim_loss,
                "ali_loss": ali_loss, "qua_loss": qua_loss}
        # TODO(synk): DCC() buffer-refinement loop is not part of forward(); not ported.


if __name__ == "__main__":
    cfg = SimpleNamespace(ALPHA=0.1, BETA=0.5, GAMMA=1.0, NUM_DCC=1, BITS=32)
    num_train, batch, num_classes = 64, 12, 8

    key = jax.random.PRNGKey(0)
    k_b, k_y, k_f, k_t, k_l = jax.random.split(key, 5)

    train_onehot = (jax.random.uniform(k_y, (num_train, num_classes)) > 0.7
                    ).astype(jnp.float32)
    # tile=8 exercises the multi-block grid, symmetry skip and padding path.
    crit = KiddoCriterionJAX(cfg, num_train, train_onehot, k_b, tile=8)

    image_hash_features = jnp.tanh(
        jax.random.normal(k_f, (batch, cfg.BITS), dtype=jnp.float32))
    textual_knowledge = jax.random.normal(
        k_t, (num_classes, cfg.BITS), dtype=jnp.float32)
    onehot_labels = (jax.random.uniform(k_l, (batch, num_classes)) > 0.6
                     ).astype(jnp.float32)
    indices = (jnp.arange(batch, dtype=jnp.int32) * 5) % num_train  # distinct

    outputs = {"image_hash_features": image_hash_features,
               "textual_knowledge": textual_knowledge,
               "current_epoch": 0}
    batch_data = {"onehot_labels": onehot_labels, "indices": indices}

    res = crit.forward(outputs, batch_data)
    jax.block_until_ready(res["loss"])

    # --- check 0: U was row-scattered in place --------------------------------
    U_expected = jnp.zeros((num_train, cfg.BITS), jnp.float32
                           ).at[indices].set(image_hash_features)
    assert jnp.allclose(crit.U, U_expected, atol=1e-6)

    # --- check 1: mirror the kernel's bf16-operand / f32-accum math (tight) ---
    F32 = image_hash_features
    L32 = onehot_labels
    Bb32 = crit.B[indices].astype(jnp.float32)
    Fb = F32.astype(jnp.bfloat16)
    Lb = L32.astype(jnp.bfloat16)
    Tkb = textual_knowledge.astype(jnp.bfloat16)

    theta = jnp.dot(Fb, Fb.T, preferred_element_type=jnp.float32) * 0.5
    simm = (jnp.dot(Lb, Lb.T, preferred_element_type=jnp.float32) > 0
            ).astype(jnp.float32)
    sim_ref = jnp.mean(jnp.log(1.0 + jnp.exp(-jnp.abs(theta)))
                       + jnp.maximum(theta, 0.0) - simm * theta)
    qua_ref = jnp.mean((F32 - jnp.sign(Bb32)) ** 2)
    logits_ref = jnp.dot(crit.B[indices], Tkb.T,
                         preferred_element_type=jnp.float32)
    ali_ref = jnp.mean((L32 - logits_ref) ** 2)
    loss_ref = cfg.GAMMA * sim_ref + cfg.ALPHA * ali_ref + cfg.BETA * qua_ref

    assert jnp.allclose(res["sim_loss"], sim_ref, rtol=1e-4, atol=1e-4)
    assert jnp.allclose(res["ali_loss"], ali_ref, rtol=1e-4, atol=1e-4)
    assert jnp.allclose(res["qua_loss"], qua_ref, rtol=1e-4, atol=1e-4)
    assert jnp.allclose(res["loss"], loss_ref, rtol=1e-4, atol=1e-4)

    # --- check 2: full-f32 PyTorch-equivalent math (loose; the only deviation
    # is bf16 rounding of the matmul operands) ---------------------------------
    theta32 = F32 @ F32.T / 2.0
    sim32 = (L32 @ L32.T > 0).astype(jnp.float32)
    sim_ref32 = jnp.mean(jnp.log(1.0 + jnp.exp(-jnp.abs(theta32)))
                         + jnp.maximum(theta32, 0.0) - sim32 * theta32)
    ali_ref32 = jnp.mean((L32 - Bb32 @ textual_knowledge.T) ** 2)
    loss_ref32 = (cfg.GAMMA * sim_ref32 + cfg.ALPHA * ali_ref32
                  + cfg.BETA * qua_ref)
    assert jnp.allclose(res["loss"], loss_ref32, rtol=5e-2, atol=5e-2)

    print("KERNEL_OK")
</pallas_src>

<mosaic_0001>
module attributes {stable_mosaic.version = 11 : i64} {
  func.func @_row_scatter_kernel(%arg0: memref<12xi32, #tpu.memory_space<smem>>, %arg1: memref<12x32xf32, #tpu.memory_space<vmem>>, %arg2: memref<64x32xf32, #tpu.memory_space<any>>, %arg3: memref<64x32xf32, #tpu.memory_space<any>>, %arg4: memref<!tpu.dma_semaphore, #tpu.memory_space<semaphore_mem>>) attributes {dimension_semantics = [], scalar_prefetch = 0 : i64, scratch_operands = 1 : i64, tpu.core_type = #tpu.core_type<tc>} {
    %c0_i32 = arith.constant 0 : i32
    %c12_i32 = arith.constant 12 : i32
    %0 = arith.addi %c0_i32, %c12_i32 : i32
    %c1_i32 = arith.constant 1 : i32
    scf.for %arg5 = %c0_i32 to %0 step %c1_i32  : i32 {
      %1 = arith.index_cast %arg5 : i32 to index
      %2 = memref.load %arg0[%1] : memref<12xi32, #tpu.memory_space<smem>>
      %c0_i32_1 = arith.constant 0 : i32
      %3 = tpu.memref_slice %arg1[%arg5, %c0_i32_1] : memref<12x32xf32, #tpu.memory_space<vmem>> -> memref<1x32xf32, #tpu.memory_space<vmem>>
      %c0_i32_2 = arith.constant 0 : i32
      %4 = tpu.memref_slice %arg3[%2, %c0_i32_2] : memref<64x32xf32, #tpu.memory_space<any>> -> memref<1x32xf32, #tpu.memory_space<any>>
      tpu.enqueue_dma source(%3 : memref<1x32xf32, #tpu.memory_space<vmem>>) target(%4 : memref<1x32xf32, #tpu.memory_space<any>>) target_semaphore(%arg4 : memref<!tpu.dma_semaphore, #tpu.memory_space<semaphore_mem>>)
      %c0_i32_3 = arith.constant 0 : i32
      %5 = tpu.memref_slice %arg1[%arg5, %c0_i32_3] : memref<12x32xf32, #tpu.memory_space<vmem>> -> memref<1x32xf32, #tpu.memory_space<vmem>>
      %c0_i32_4 = arith.constant 0 : i32
      %6 = tpu.memref_slice %arg3[%2, %c0_i32_4] : memref<64x32xf32, #tpu.memory_space<any>> -> memref<1x32xf32, #tpu.memory_space<any>>
      tpu.wait_dma2 semaphore(%arg4 : memref<!tpu.dma_semaphore, #tpu.memory_space<semaphore_mem>>) src(%5 : memref<1x32xf32, #tpu.memory_space<vmem>>) dst(%6 : memref<1x32xf32, #tpu.memory_space<any>>)
    }
    %c12_i32_0 = arith.constant 12 : i32
    return
  }
}

</mosaic_0001>

<llo_original>
// kernel: tpu_custom_call.1
$region0: #{tpu_custom_call.1}
  #allocation0 [shape = 'u32[]', space=smem, size = 0x4, offset = 0x4, fixed_abs, tag = 'smem constant byte address 0x4 - core index']
  #allocation1 [shape = 'u32[144,128]{1,0:T(1,128)}', space=vmem, size = 0x12000, scoped, tag = 'internal scratch']
  #allocation2 [shape = 's32[1]{0}', space=sflag, size = 0x4, scoped, tag = 'scratch operand']
  #allocation5 [shape = 's32[]', space=sflag, size = 0x4, offset = 0, fixed_abs, tag = 'sflag constant byte address 0x0 - dummy sync flag']
  %s0 = inlined_call_operand.vmem [shape: s32[12], index: 0, kind: input, shape index: {}]
  %s1 = inlined_call_operand.vmem [shape: f32[12,32], index: 1, kind: input, shape index: {}]
  %s2 = inlined_call_operand.vmem [shape: f32[64,32], index: 2, kind: input, shape index: {}, may-alias: {2,3}]
  %s3 = inlined_call_operand.vmem [shape: f32[64,32], index: 3, kind: output, shape index: {}, may-alias: {2,3}]
  %s4 = sld [smem:[#allocation0]]
  $region51: #{tpu_custom_call.1} parent=0
    _
  %s6 = ssub.s32 1, %s4
  %s7 = scalar_select 0, %s6, %s4
  $region1: #{tpu_custom_call.1} parent=0
    #allocation3 [shape = 'u8[512]{0}', space=smem, size = 0x200, scoped, tag = 'input window, operand 0, single buffered']
    #allocation4 [shape = 's32[1]{0}', space=sflag, size = 0x4, scoped, tag = 'scoped memory for tpu_custom_call.1']
    %8 = vsyncpa [#allocation4], 0
    // Predicated region
    $region2: #{tpu_custom_call.1} parent=1 // pred_check
      _
    $region3: #{tpu_custom_call.1} parent=1 // pred_check_branch
      %10 = sbr.rel (0) target = $region5
    $region4: #{tpu_custom_call.1} parent=1 // pred_region
      %s12 = ssub.s32 16, 16
      %13 = vsyncadd [#allocation4], %s12
      %s15 = sshll.u32 %s0, 4
      %s16 = int_to_ptr.vmem [resolvable:$true] %s15
      %18 = dma.vmem_to_smem %s16, 16, [#allocation3], [#allocation4]
    $region5: #{tpu_custom_call.1} parent=1 // pred_fallthru
      _
    // Predicated region
    $region6: #{tpu_custom_call.1} parent=1 // pred_check
      _
    $region7: #{tpu_custom_call.1} parent=1 // pred_check_branch
      %20 = sbr.rel (0) target = $region9
    $region8: #{tpu_custom_call.1} parent=1 // pred_region
      _
    $region9: #{tpu_custom_call.1} parent=1 // pred_fallthru
      _
    // Predicated region
    $region10: #{tpu_custom_call.1} parent=1 // pred_check
      _
    $region11: #{tpu_custom_call.1} parent=1 // pred_check_branch
      %22 = sbr.rel (0) target = $region13
    $region12: #{tpu_custom_call.1} parent=1 // pred_region
      %23 = dma.done [#allocation4], 16
    $region13: #{tpu_custom_call.1} parent=1 // pred_fallthru
      _
    %24 = sfence
    loop: start=0, step=1, limit=12
    $region14: #{tpu_custom_call.1} parent=1 // loop_pre_header
      _
    $region15: #{tpu_custom_call.1} parent=1 // loop_header
      %s26 = sphi 0, %s30
      %p27 = scmp.ge.s32.totalorder %s26, 12
    $region16: #{tpu_custom_call.1} parent=1 // loop_header_branch
      %29 = sbr.rel (%p27) target = $region20
    $region17: #{tpu_custom_call.1} parent=1 // loop_body
      %s31 = sld [smem:[#allocation3 + %s26]]
      %s32 = scalar_lea.vmem %s1, %s26
      %s33 = scalar_lea.vmem %s3, %s31
      %p35 = scmp.lt.u32.totalorder 1, 8
      %p36 = pneg %p35
      // Predicated region
      $region21: #{tpu_custom_call.1} parent=17 // pred_check
        _
      $region22: #{tpu_custom_call.1} parent=17 // pred_check_branch
        %38 = sbr.rel (%p35) target = $region24
      $region23: #{tpu_custom_call.1} parent=17 // pred_region
        %s53 = sand.u32 1, 7
        %p54 = scmp.eq.s32.totalorder %s53, 0
        %p55 = pneg %p54
        // Predicated region
        $region36: #{tpu_custom_call.1} parent=23 // pred_check
          _
        $region37: #{tpu_custom_call.1} parent=23 // pred_check_branch
          %57 = sbr.rel (%p54) target = $region39
        $region38: #{tpu_custom_call.1} parent=23 // pred_region
          %s58 = sand.u32 1, 7
          %s59 = ssub.s32 1, %s58
          %s60 = scalar_lea.vmem %s32, %s59
          %s61 = ssub.s32 1, %s58
          %s62 = scalar_lea.vmem %s33, %s61
          %s63 = sshllo.u32 0, %s58
          loop: start=0, step=1, limit=1
          $region40: #{tpu_custom_call.1} parent=38 // loop_pre_header
            _
          $region41: #{tpu_custom_call.1} parent=38 // loop_header
            %s65 = sphi 0, %s69
            %p66 = scmp.ge.s32.totalorder %s65, 1
            %s70 = sphi %s60, %s60
            %s71 = sphi %s62, %s62
          $region42: #{tpu_custom_call.1} parent=38 // loop_header_branch
            %68 = sbr.rel (%p66) target = $region46
          $region43: #{tpu_custom_call.1} parent=38 // loop_body
            %v72 = vld [vmem:[%s70] sm:%s63]
            %73 = vst [vmem:[%s71] sm:%s63] %v72
          $region44: #{tpu_custom_call.1} parent=38 // loop_footer
            %s69 = sadd.s32 1, %s65
          $region45: #{tpu_custom_call.1} parent=38 // loop_footer_branch
            %64 = sbr.rel target = $region41
          $region46: #{tpu_custom_call.1} parent=38 // loop_exit
            _
        $region39: #{tpu_custom_call.1} parent=23 // pred_fallthru
          _
      $region24: #{tpu_custom_call.1} parent=17 // pred_fallthru
        _
      // Predicated region
      $region25: #{tpu_custom_call.1} parent=17 // pred_check
        %p39 = pneg %p35
      $region26: #{tpu_custom_call.1} parent=17 // pred_check_branch
        %41 = sbr.rel (%p39) target = $region28
      $region27: #{tpu_custom_call.1} parent=17 // pred_region
        %s42 = sshllo.u32 0, 1
        loop: start=0, step=1, limit=1
        $region29: #{tpu_custom_call.1} parent=27 // loop_pre_header
          _
        $region30: #{tpu_custom_call.1} parent=27 // loop_header
          %s44 = sphi 0, %s48
          %p45 = scmp.ge.s32.totalorder %s44, 1
          %s49 = sphi %s32, %s32
          %s50 = sphi %s33, %s33
        $region31: #{tpu_custom_call.1} parent=27 // loop_header_branch
          %47 = sbr.rel (%p45) target = $region35
        $region32: #{tpu_custom_call.1} parent=27 // loop_body
          %v51 = vld [vmem:[%s49] sm:%s42]
          %52 = vst [vmem:[%s50] sm:%s42] %v51
        $region33: #{tpu_custom_call.1} parent=27 // loop_footer
          %s48 = sadd.s32 1, %s44
        $region34: #{tpu_custom_call.1} parent=27 // loop_footer_branch
          %43 = sbr.rel target = $region30
        $region35: #{tpu_custom_call.1} parent=27 // loop_exit
          _
      $region28: #{tpu_custom_call.1} parent=17 // pred_fallthru
        _
      // Predicated region
      $region47: #{tpu_custom_call.1} parent=17 // pred_check
        _
      $region48: #{tpu_custom_call.1} parent=17 // pred_check_branch
        %76 = sbr.rel (0) target = $region50
      $region49: #{tpu_custom_call.1} parent=17 // pred_region
        %77 = vsyncadd [#allocation2], 16
      $region50: #{tpu_custom_call.1} parent=17 // pred_fallthru
        _
      %s78 = smul.u32 1, 1
      %s79 = sshll.u32 %s78, 4
      %80 = dma.done [#allocation2], %s79
    $region18: #{tpu_custom_call.1} parent=1 // loop_footer
      %s30 = sadd.s32 1, %s26
    $region19: #{tpu_custom_call.1} parent=1 // loop_footer_branch
      %25 = sbr.rel target = $region15
    $region20: #{tpu_custom_call.1} parent=1 // loop_exit
      _
    %81 = vsyncpa [#allocation4], 1
  %82 = vsyncmov [#allocation2]
  %s83 = vpop.sfrf %82
  %p84 = scmp.eq.s32.totalorder %s83, 0
  %p85 = pneg %p84
  %87 = shalt.err (%p85)

</llo_original>
